<compile_context>
chip_gen: v7x
topology: tpu7x:2x2x1
jax: 0.10.0
libtpu: 0.0.40
codegen_flags: <defaults>
</compile_context>

<pallas_src>
import math

import jax
import jax.numpy as jnp
from jax.experimental import pallas as pl
from jax.experimental.pallas import tpu as pltpu


def _dma_copy_kernel(x_hbm, o_hbm, sem):
    """One grid step copies its contiguous chunk of the input HBM->HBM."""
    i = pl.program_id(0)
    cp = pltpu.make_async_copy(x_hbm.at[i], o_hbm.at[i], sem)
    cp.start()
    cp.wait()


def yolo_loss_forward(x):
    """Pallas TPU implementation of YoloLoss.forward (identity on the input).

    NOTE: the zero-cost implementation is simply `return x`; the kernel below
    is the closest-to-roofline materialized copy: a pad-free HBM->HBM DMA with
    no VMEM bounce, split across a parallel grid axis for v7x's two cores.
    """
    orig_shape = x.shape
    total = math.prod(orig_shape) if orig_shape else 1
    if total == 0:
        return x

    # Split the flat tensor into `nsplit` equal contiguous chunks.  No padding,
    # no output slicing — the reshapes below are metadata-only on a contiguous
    # array, so the kernel does exactly one HBM read + one HBM write.
    nsplit = 2 if (total >= 2 and total % 2 == 0) else 1
    cols = total // nsplit
    x2 = x.reshape(nsplit, cols)

    out2 = pl.pallas_call(
        _dma_copy_kernel,
        out_shape=jax.ShapeDtypeStruct((nsplit, cols), x.dtype),
        grid=(nsplit,),
        in_specs=[pl.BlockSpec(memory_space=pl.ANY)],
        out_specs=pl.BlockSpec(memory_space=pl.ANY),
        scratch_shapes=[pltpu.SemaphoreType.DMA(())],
        compiler_params=pltpu.CompilerParams(
            # v7x: one half-tensor DMA per TensorCore; v5e/v6e: sequential.
            dimension_semantics=("parallel",),
        ),
    )(x2)

    return out2.reshape(orig_shape)


class YoloLossPallas:
    """Mirror of the PyTorch YoloLoss module (parameters set deterministically)."""

    def __init__(self, anchors, num_classes, img_size, label_smooth=0):
        self.anchors = anchors
        self.num_anchors = len(anchors)
        self.num_classes = num_classes
        self.bbox_attrs = 4 + 1 + num_classes
        self.img_size = img_size
        self.feature_length = [img_size[0] // 8, img_size[0] // 16, img_size[0] // 32]
        self.label_smooth = label_smooth
        self.ignore_threshold = 0.7
        self.lambda_conf = 1.0
        self.lambda_cls = 1.0
        self.lambda_loc = 1.0
        # TODO(synk): YOLO target-building / IoU losses live only in __init__ of
        # the reference module and are never executed in forward(), so they are
        # intentionally not implemented here.

    def forward(self, x):
        return yolo_loss_forward(x)


if __name__ == "__main__":
    # Small, deterministic example consistent with a YOLO head output:
    # batch=2, num_anchors=3, num_classes=2 -> channels = 3 * (4+1+2) = 21,
    # img_size=(128,128) -> stride-8 feature map of 16x16.
    anchors = [(10, 13), (16, 30), (33, 23)]
    num_classes = 2
    img_size = (128, 128)

    loss_mod = YoloLossPallas(anchors, num_classes, img_size)

    key = jax.random.PRNGKey(0)
    n, c, h, w = 2, loss_mod.num_anchors * loss_mod.bbox_attrs, 16, 16
    x = jax.random.normal(key, (n, c, h, w), dtype=jnp.float32)

    out = loss_mod.forward(x)
    out = jax.block_until_ready(out)

    assert out.shape == x.shape and out.dtype == x.dtype
    assert bool(jnp.all(out == x))
    print("KERNEL_OK")
</pallas_src>

<mosaic_0001>
module attributes {stable_mosaic.version = 11 : i64} {
  func.func @_dma_copy_kernel(%arg0: i32, %arg1: memref<2x5376xf32, #tpu.memory_space<any>>, %arg2: memref<2x5376xf32, #tpu.memory_space<any>>, %arg3: memref<!tpu.dma_semaphore, #tpu.memory_space<semaphore_mem>>) attributes {dimension_semantics = [#tpu.dimension_semantics<parallel>], iteration_bounds = array<i64: 2>, scalar_prefetch = 0 : i64, scratch_operands = 1 : i64, tpu.core_type = #tpu.core_type<tc>, window_params = [{}, {}]} {
    %c0_i32 = arith.constant 0 : i32
    %0 = tpu.memref_slice %arg1[%arg0, %c0_i32] : memref<2x5376xf32, #tpu.memory_space<any>> -> memref<1x5376xf32, #tpu.memory_space<any>>
    %1 = tpu.memref_squeeze %0 : memref<1x5376xf32, #tpu.memory_space<any>> -> memref<5376xf32, #tpu.memory_space<any>>
    %c0_i32_0 = arith.constant 0 : i32
    %2 = tpu.memref_slice %arg2[%arg0, %c0_i32_0] : memref<2x5376xf32, #tpu.memory_space<any>> -> memref<1x5376xf32, #tpu.memory_space<any>>
    %3 = tpu.memref_squeeze %2 : memref<1x5376xf32, #tpu.memory_space<any>> -> memref<5376xf32, #tpu.memory_space<any>>
    tpu.enqueue_dma source(%1 : memref<5376xf32, #tpu.memory_space<any>>) target(%3 : memref<5376xf32, #tpu.memory_space<any>>) target_semaphore(%arg3 : memref<!tpu.dma_semaphore, #tpu.memory_space<semaphore_mem>>)
    %c0_i32_1 = arith.constant 0 : i32
    %4 = tpu.memref_slice %arg1[%arg0, %c0_i32_1] : memref<2x5376xf32, #tpu.memory_space<any>> -> memref<1x5376xf32, #tpu.memory_space<any>>
    %5 = tpu.memref_squeeze %4 : memref<1x5376xf32, #tpu.memory_space<any>> -> memref<5376xf32, #tpu.memory_space<any>>
    %c0_i32_2 = arith.constant 0 : i32
    %6 = tpu.memref_slice %arg2[%arg0, %c0_i32_2] : memref<2x5376xf32, #tpu.memory_space<any>> -> memref<1x5376xf32, #tpu.memory_space<any>>
    %7 = tpu.memref_squeeze %6 : memref<1x5376xf32, #tpu.memory_space<any>> -> memref<5376xf32, #tpu.memory_space<any>>
    tpu.wait_dma2 semaphore(%arg3 : memref<!tpu.dma_semaphore, #tpu.memory_space<semaphore_mem>>) src(%5 : memref<5376xf32, #tpu.memory_space<any>>) dst(%7 : memref<5376xf32, #tpu.memory_space<any>>)
    return
  }
}

</mosaic_0001>

<llo_original>
// kernel: tpu_custom_call.1
$region0: #{tpu_custom_call.1}
  #allocation0 [shape = 'u32[]', space=smem, size = 0x4, offset = 0x4, fixed_abs, tag = 'smem constant byte address 0x4 - core index']
  #allocation1 [shape = 'u32[144,128]{1,0:T(1,128)}', space=vmem, size = 0x12000, scoped, tag = 'internal scratch']
  #allocation2 [shape = 's32[1]{0}', space=sflag, size = 0x4, scoped, tag = 'scratch operand']
  #allocation3 [shape = 's32[]', space=sflag, size = 0x4, offset = 0, fixed_abs, tag = 'sflag constant byte address 0x0 - dummy sync flag']
  %s0 = inlined_call_operand.hbm [shape: f32[2,5376], index: 0, kind: input, shape index: {}]
  %s1 = inlined_call_operand.hbm [shape: f32[2,5376], index: 1, kind: output, shape index: {}]
  %s2 = sld [smem:[#allocation0]]
  $region9: #{tpu_custom_call.1} parent=0
    _
  %s4 = ssub.s32 1, %s2
  %s5 = scalar_select 0, %s4, %s2
  loop: start=0, step=1, limit=2
  $region2: #{tpu_custom_call.1} parent=0 // loop_pre_header
    _
  $region3: #{tpu_custom_call.1} parent=0 // loop_header
    %s7 = sphi 0, %s11
    %p8 = scmp.ge.s32.totalorder %s7, 2
  $region4: #{tpu_custom_call.1} parent=0 // loop_header_branch
    %10 = sbr.rel (%p8) target = $region8
  $region5: #{tpu_custom_call.1} parent=0 // loop_body
    #allocation4 [shape = 'u32[3]{0}', space=smem, size = 0xc, scoped, tag = 'DMA stride descriptor']
    %s12 = sadd.s32 %s7, 1
    %s13 = sshrl.u32 %s7, 1
    %s14 = sand.u32 %s7, 1
    %s15 = smul.u32 %s13, 84
    %s16 = sadd.s32 %s14, %s15
    %s17 = smul.addr %s16, 16
    %s18 = scalar_lea.hbm %s0, %s17
    %s19 = smul.addr %s16, 16
    %s20 = scalar_lea.hbm %s1, %s19
    %s22 = sshll.u32 1, 14
    %s23 = sxor.u32 4294967295, %s22
    %s26 = sshll.u32 3, 24
    %s27 = sxor.u32 4294967295, %s26
    %s28 = sand.u32 0, %s27
    %s30 = sor.u32 %s28, 0
    %33 = sst [smem:[#allocation4]] 32
    %s34 = scalar_lea.smem [#allocation4], 1
    %35 = sst [smem:[%s34]] 32
    %s36 = scalar_lea.smem [#allocation4], 2
    %37 = sst [smem:[%s36]] 1
    %39 = dma.general %s18, 672, %s20, [#allocation2], [#allocation3], [#allocation4], %s30, 0
    %41 = dma.done [#allocation2], 672
  $region6: #{tpu_custom_call.1} parent=0 // loop_footer
    %s11 = sadd.s32 1, %s7
  $region7: #{tpu_custom_call.1} parent=0 // loop_footer_branch
    %6 = sbr.rel target = $region3
  $region8: #{tpu_custom_call.1} parent=0 // loop_exit
    _
  %42 = vsyncmov [#allocation2]
  %s43 = vpop.sfrf %42
  %p44 = scmp.eq.s32.totalorder %s43, 0
  %p45 = pneg %p44
  %47 = shalt.err (%p45)

</llo_original>
